<compile_context>
chip_gen: v6e
topology: v6e:2x2x1
jax: 0.10.0
libtpu: 0.0.40
codegen_flags: <defaults>
</compile_context>

<pallas_src>
import functools

import jax
import jax.numpy as jnp
from jax.experimental import pallas as pl
from jax.experimental.pallas import tpu as pltpu


def folded_mlp_kernel(x_ref, w_ref, b_ref, o_ref):
    """One batch tile: (block_m, K) @ (K, out_dim) + bias, f32 MXU accumulation."""
    acc = jnp.dot(x_ref[...], w_ref[...], preferred_element_type=jnp.float32)
    # TODO(synk): out_dim=4 makes this a lane-sparse (4/128) masked store; a
    # lane-dense transposed (out_dim, block_m) store would cut vst count ~32x,
    # but at the default tile sizes the store slot is hidden under the x DMA,
    # so we keep the simple layout (and avoid an in-kernel relayout).
    o_ref[...] = (acc + b_ref[...]).astype(o_ref.dtype)


def fold_params(params, compute_dtype=jnp.float32):
    """Collapse the affine chain into a single (K, out_dim) weight and (1, out_dim) bias.

    NOTE: exact ONLY because `NeuralNetwork.forward` has no activation/dropout
    between the Linear layers.  Call once at param-prep time; do NOT re-fold
    inside the per-call forward.
    """
    w_fold = jnp.asarray(params[0][0], jnp.float32)
    b_fold = jnp.asarray(params[0][1], jnp.float32)
    for w_t, b in params[1:]:
        assert w_t.shape[0] == w_fold.shape[1], "layer chain shapes do not compose"
        w_t = jnp.asarray(w_t, jnp.float32)
        w_fold = w_fold @ w_t
        b_fold = b_fold @ w_t + jnp.asarray(b, jnp.float32)
    # Bias stays f32: it is added after the f32-accumulated matmul.
    return jnp.asarray(w_fold, compute_dtype), b_fold.reshape(1, -1)


@functools.partial(jax.jit, static_argnames=("block_m",))
def neural_network_forward(x, w_fold, b_fold, *, block_m=1024):
    """x: (B, 128, 2); w_fold: (256, 4); b_fold: (1, 4) -- pre-folded once.

    block_m: batch rows per grid step.  512-1024 reaches ~85% of the HBM
    roofline on v5e/v6e; prefer 2048-4096 on v7x (3.2 TB/s makes the ~0.35us
    per-step overhead relatively expensive).  All such tiles fit VMEM easily.
    """
    B = x.shape[0]
    x_flat = x.reshape(B, -1)                       # Flatten (bitcast-compatible reshape)
    K, out_dim = w_fold.shape
    assert x_flat.shape[1] == K

    x_isz = jnp.dtype(x_flat.dtype).itemsize
    w_isz = jnp.dtype(w_fold.dtype).itemsize
    align = 32 // x_isz            # sublane packing: 8 rows f32, 16 bf16, 32 int8

    if B <= align or (B <= block_m and B <= 512):
        # Tiny batch: one full-extent tile (a full-dim block is legal for any B).
        block_m = B
    else:
        # At least two batch tiles so both v7x TensorCores get work; align to the
        # dtype's sublane packing.  A ragged last tile is handled by Pallas block
        # masking -- no jnp.pad, no extra HBM pass over x.
        block_m = min(block_m, pl.cdiv(pl.cdiv(B, 2), align) * align)
        block_m = max(align, (block_m // align) * align)
    grid_m = pl.cdiv(B, block_m)

    # Streamed x tiles: triple-buffer on long grids (the pipeline is pure DMA,
    # compute per tile is near zero).
    if grid_m >= 3:
        x_spec = pl.BlockSpec((block_m, K), lambda i: (i, 0),
                              pipeline_mode=pl.Buffered(3))
        n_x_buf = 3
    else:
        x_spec = pl.BlockSpec((block_m, K), lambda i: (i, 0))
        n_x_buf = 2

    # VMEM budget: buffered x tiles + double-buffered out tile + resident W/b,
    # with headroom; capped at 32 MiB (safe scoped limit on v5e/v6e/v7x).
    need = (n_x_buf * block_m * K * x_isz
            + 2 * block_m * out_dim * x_isz
            + K * out_dim * w_isz
            + out_dim * 4)
    vmem_limit = int(min(max(4 * need, 4 << 20), 32 << 20))

    cost = pl.CostEstimate(
        flops=2 * B * K * out_dim,
        transcendentals=0,
        bytes_accessed=B * K * x_isz + B * out_dim * x_isz + K * out_dim * w_isz,
    )

    return pl.pallas_call(
        folded_mlp_kernel,
        out_shape=jax.ShapeDtypeStruct((B, out_dim), x.dtype),
        grid=(grid_m,),
        in_specs=[
            x_spec,                                            # streamed batch tiles
            pl.BlockSpec((K, out_dim), lambda i: (0, 0)),      # resident folded weight
            pl.BlockSpec((1, out_dim), lambda i: (0, 0)),      # resident folded bias
        ],
        out_specs=pl.BlockSpec((block_m, out_dim), lambda i: (i, 0)),
        compiler_params=pltpu.CompilerParams(
            dimension_semantics=("parallel",),     # batch grid shards across TCs
            vmem_limit_bytes=vmem_limit,
        ),
        cost_estimate=cost,
    )(x_flat, w_fold, b_fold)


def init_params(key, num_layers, units_fc, num_coords=128, num_dims=2, num_params=4):
    """Deterministic init mirroring nn.Linear shapes (weights stored transposed)."""
    dims = [num_coords * num_dims, num_coords, units_fc[0]]
    for i in range(1, num_layers):
        dims.append(units_fc[i])
    dims.append(num_params)

    params = []
    for li in range(len(dims) - 1):
        fan_in, fan_out = dims[li], dims[li + 1]
        key, kw, kb = jax.random.split(key, 3)
        bound = 1.0 / jnp.sqrt(fan_in)
        # PyTorch nn.Linear weight is (out, in); we store W^T = (in, out).
        w_t = jax.random.uniform(kw, (fan_in, fan_out), jnp.float32, -bound, bound)
        b = jax.random.uniform(kb, (fan_out,), jnp.float32, -bound, bound)
        params.append((w_t, b))
    return params


if __name__ == "__main__":
    num_layers = 2
    units_fc = [32, 16]

    key = jax.random.PRNGKey(0)
    key, kx, kx2 = jax.random.split(key, 3)
    params = init_params(key, num_layers, units_fc)

    # Fold ONCE at param-prep time (hoisted out of the per-call forward path).
    w_fold, b_fold = fold_params(params)                          # f32 path
    w_fold_bf16, b_fold_bf16 = fold_params(params, jnp.bfloat16)  # bf16 path

    def reference(xin):
        h = xin.reshape(xin.shape[0], -1).astype(jnp.float32)
        for w_t, b in params:
            h = h @ w_t + b
        return h

    # 1) Small batch -> single full-extent tile (default block_m).
    B = 32
    x = jax.random.normal(kx, (B, 128, 2), dtype=jnp.float32)
    out = neural_network_forward(x, w_fold, b_fold)
    jax.block_until_ready(out)
    ref = reference(x)
    assert out.shape == (B, 4)
    assert jnp.allclose(out, ref, atol=2e-3, rtol=2e-3), float(jnp.max(jnp.abs(out - ref)))

    # 2) Multi-tile streamed grid (divides evenly) -> pipelined + Buffered(3) path.
    B2 = 512
    x2 = jax.random.normal(kx2, (B2, 128, 2), dtype=jnp.float32)
    out2 = neural_network_forward(x2, w_fold, b_fold, block_m=128)
    jax.block_until_ready(out2)
    ref2 = reference(x2)
    assert jnp.allclose(out2, ref2, atol=2e-3, rtol=2e-3)

    # 3) Ragged batch (no jnp.pad): last tile is a masked partial block.
    B3 = 500
    x3 = x2[:B3]
    out3 = neural_network_forward(x3, w_fold, b_fold, block_m=128)
    jax.block_until_ready(out3)
    assert out3.shape == (B3, 4)
    assert jnp.allclose(out3, ref2[:B3], atol=2e-3, rtol=2e-3)

    # 4) bf16 streaming path: x already lives in bf16 upstream (no wrapper cast),
    #    f32 accumulation in the kernel; strictly opt-in, looser tolerance.
    x_bf16 = x.astype(jnp.bfloat16)
    out_bf16 = neural_network_forward(x_bf16, w_fold_bf16, b_fold_bf16)
    jax.block_until_ready(out_bf16)
    assert jnp.allclose(out_bf16.astype(jnp.float32), ref, atol=5e-2, rtol=5e-2)

    print("KERNEL_OK")
</pallas_src>

<mosaic_0001>
module attributes {stable_mosaic.version = 11 : i64} {
  func.func @folded_mlp_kernel(%arg0: i32, %arg1: memref<32x256xf32, #tpu.memory_space<vmem>>, %arg2: memref<256x4xf32, #tpu.memory_space<vmem>>, %arg3: memref<1x4xf32, #tpu.memory_space<vmem>>, %arg4: memref<32x4xf32, #tpu.memory_space<vmem>>) attributes {dimension_semantics = [#tpu.dimension_semantics<parallel>], iteration_bounds = array<i64: 1>, scalar_prefetch = 0 : i64, scratch_operands = 0 : i64, tpu.core_type = #tpu.core_type<tc>, window_params = [{transform_indices = @transform_0, window_bounds = array<i64: 32, 256>}, {pipeline_mode = #tpu.pipeline_mode<synchronous>, transform_indices = @transform_1, window_bounds = array<i64: 256, 4>}, {pipeline_mode = #tpu.pipeline_mode<synchronous>, transform_indices = @transform_2, window_bounds = array<i64: 1, 4>}, {transform_indices = @transform_3, window_bounds = array<i64: 32, 4>}]} {
    %c0 = arith.constant 0 : index
    %c0_0 = arith.constant 0 : index
    %0 = vector.load %arg1[%c0, %c0_0] : memref<32x256xf32, #tpu.memory_space<vmem>>, vector<32x256xf32>
    %c0_1 = arith.constant 0 : index
    %c0_2 = arith.constant 0 : index
    %1 = vector.load %arg2[%c0_1, %c0_2] : memref<256x4xf32, #tpu.memory_space<vmem>>, vector<256x4xf32>
    %cst = arith.constant dense<0.000000e+00> : vector<32x4xf32>
    %2 = tpu.matmul %0, %1, %cst {dimension_numbers = #tpu.dot_dimension_numbers<[1], [0], [0], [1], [0, 0, 1, 1], [], []>} : vector<32x256xf32>, vector<256x4xf32>, vector<32x4xf32> -> vector<32x4xf32>
    %c0_3 = arith.constant 0 : index
    %c0_4 = arith.constant 0 : index
    %3 = vector.load %arg3[%c0_3, %c0_4] : memref<1x4xf32, #tpu.memory_space<vmem>>, vector<1x4xf32>
    %4 = vector.broadcast %3 : vector<1x4xf32> to vector<32x4xf32>
    %5 = arith.addf %2, %4 : vector<32x4xf32>
    %c0_5 = arith.constant 0 : index
    %c0_6 = arith.constant 0 : index
    %6 = vector.load %arg4[%c0_5, %c0_6] : memref<32x4xf32, #tpu.memory_space<vmem>>, vector<32x4xf32>
    tpu.vector_store %arg4[%c0_5, %c0_6], %5 {strides = array<i32>} : memref<32x4xf32, #tpu.memory_space<vmem>>, vector<32x4xf32>,
    return
  }
  func.func @transform_0(%arg0: i32) -> (i32, i32) {
    %c0_i32 = arith.constant 0 : i32
    %c0_i32_0 = arith.constant 0 : i32
    return %arg0, %c0_i32 : i32, i32
  }
  func.func @transform_1(%arg0: i32) -> (i32, i32) {
    %c0_i32 = arith.constant 0 : i32
    %c0_i32_0 = arith.constant 0 : i32
    %c0_i32_1 = arith.constant 0 : i32
    return %c0_i32, %c0_i32_0 : i32, i32
  }
  func.func @transform_2(%arg0: i32) -> (i32, i32) {
    %c0_i32 = arith.constant 0 : i32
    %c0_i32_0 = arith.constant 0 : i32
    %c0_i32_1 = arith.constant 0 : i32
    return %c0_i32, %c0_i32_0 : i32, i32
  }
  func.func @transform_3(%arg0: i32) -> (i32, i32) {
    %c0_i32 = arith.constant 0 : i32
    %c0_i32_0 = arith.constant 0 : i32
    return %arg0, %c0_i32 : i32, i32
  }
}

</mosaic_0001>

<llo_original>
// kernel: neural_network_forward.1
$region0: #{neural_network_forward.1}
  #allocation0 [shape = 'u32[]', space=smem, size = 0x4, offset = 0x4, fixed_abs, tag = 'smem constant byte address 0x4 - core index']
  #allocation1 [shape = 'u32[144,128]{1,0:T(1,128)}', space=vmem, size = 0x12000, scoped, tag = 'internal scratch']
  %s0 = inlined_call_operand.vmem [shape: f32[32,256], index: 0, kind: input, shape index: {}]
  %s1 = inlined_call_operand.vmem [shape: f32[256,4], index: 1, kind: input, shape index: {}]
  %s2 = inlined_call_operand.vmem [shape: f32[1,4], index: 2, kind: input, shape index: {}]
  %s3 = inlined_call_operand.vmem [shape: f32[32,4], index: 3, kind: output, shape index: {}]
  %s4 = sld [smem:[#allocation0]]
  $region22: #{neural_network_forward.1} parent=0
    _
  %s6 = ssub.s32 1, %s4
  %s7 = scalar_select 0, %s6, %s4
  // Predicated region
  $region2: #{neural_network_forward.1} parent=0 // pred_check
    _
  $region3: #{neural_network_forward.1} parent=0 // pred_check_branch
    %9 = sbr.rel (0) target = $region5
  $region4: #{neural_network_forward.1} parent=0 // pred_region
    _
  $region5: #{neural_network_forward.1} parent=0 // pred_fallthru
    _
  // Predicated region
  $region6: #{neural_network_forward.1} parent=0 // pred_check
    _
  $region7: #{neural_network_forward.1} parent=0 // pred_check_branch
    %11 = sbr.rel (0) target = $region9
  $region8: #{neural_network_forward.1} parent=0 // pred_region
    _
  $region9: #{neural_network_forward.1} parent=0 // pred_fallthru
    _
  // Predicated region
  $region10: #{neural_network_forward.1} parent=0 // pred_check
    _
  $region11: #{neural_network_forward.1} parent=0 // pred_check_branch
    %13 = sbr.rel (0) target = $region13
  $region12: #{neural_network_forward.1} parent=0 // pred_region
    _
  $region13: #{neural_network_forward.1} parent=0 // pred_fallthru
    _
  %v14 = vld [vmem:[%s0] sm:$0xff]
  %v15 = vld [vmem:[%s0 + $0x8] sm:$0xff]
  %v16 = vld [vmem:[%s0 + $0x10] sm:$0xff]
  %v17 = vld [vmem:[%s0 + $0x18] sm:$0xff]
  %v18 = vld [vmem:[%s0 + $0x20] sm:$0xff]
  %v19 = vld [vmem:[%s0 + $0x28] sm:$0xff]
  %v20 = vld [vmem:[%s0 + $0x30] sm:$0xff]
  %v21 = vld [vmem:[%s0 + $0x38] sm:$0xff]
  %v22 = vld [vmem:[%s1] sm:$0xff]
  %v23 = vld [vmem:[%s1 + $0x8] sm:$0xff]
  %v24 = vld [vmem:[%s1 + $0x10] sm:$0xff]
  %v25 = vld [vmem:[%s1 + $0x18] sm:$0xff]
  %v26 = vld [vmem:[%s1 + $0x20] sm:$0xff]
  %v27 = vld [vmem:[%s1 + $0x28] sm:$0xff]
  %v28 = vld [vmem:[%s1 + $0x30] sm:$0xff]
  %v29 = vld [vmem:[%s1 + $0x38] sm:$0xff]
  %v30 = vld [vmem:[%s1 + $0x40] sm:$0xff]
  %v31 = vld [vmem:[%s1 + $0x48] sm:$0xff]
  %v32 = vld [vmem:[%s1 + $0x50] sm:$0xff]
  %v33 = vld [vmem:[%s1 + $0x58] sm:$0xff]
  %v34 = vld [vmem:[%s1 + $0x60] sm:$0xff]
  %v35 = vld [vmem:[%s1 + $0x68] sm:$0xff]
  %v36 = vld [vmem:[%s1 + $0x70] sm:$0xff]
  %v37 = vld [vmem:[%s1 + $0x78] sm:$0xff]
  %v38 = vld [vmem:[%s1 + $0x80] sm:$0xff]
  %v39 = vld [vmem:[%s1 + $0x88] sm:$0xff]
  %v40 = vld [vmem:[%s1 + $0x90] sm:$0xff]
  %v41 = vld [vmem:[%s1 + $0x98] sm:$0xff]
  %v42 = vld [vmem:[%s1 + $0xa0] sm:$0xff]
  %v43 = vld [vmem:[%s1 + $0xa8] sm:$0xff]
  %v44 = vld [vmem:[%s1 + $0xb0] sm:$0xff]
  %v45 = vld [vmem:[%s1 + $0xb8] sm:$0xff]
  %v46 = vld [vmem:[%s1 + $0xc0] sm:$0xff]
  %v47 = vld [vmem:[%s1 + $0xc8] sm:$0xff]
  %v48 = vld [vmem:[%s1 + $0xd0] sm:$0xff]
  %v49 = vld [vmem:[%s1 + $0xd8] sm:$0xff]
  %v50 = vld [vmem:[%s1 + $0xe0] sm:$0xff]
  %v51 = vld [vmem:[%s1 + $0xe8] sm:$0xff]
  %v52 = vld [vmem:[%s1 + $0xf0] sm:$0xff]
  %v53 = vld [vmem:[%s1 + $0xf8] sm:$0xff]
  %v54 = vld [vmem:[%s2] sm:$0x1]
  %v56 = vlaneseq
  %v57 = vshrl.u32 %v56, 7
  %v58 = vsub.s32 0, %v57
  %v59 = vrot.slane %v54, %v58
  %61 = vmatprep.subr.mxu0 0.0
  %62 = vmatpush1.msra.mxu0 %v37
  %63 = vmatprep.subr.mxu0 0.0
  %64 = vmatpush1.msra.mxu0 %v36
  %65 = vmatprep.subr.mxu0 0.0
  %66 = vmatpush1.msra.mxu0 %v35
  %67 = vmatprep.subr.mxu0 0.0
  %68 = vmatpush1.msra.mxu0 %v34
  %69 = vmatprep.subr.mxu0 0.0
  %70 = vmatpush1.msra.mxu0 %v33
  %71 = vmatprep.subr.mxu0 0.0
  %72 = vmatpush1.msra.mxu0 %v32
  %73 = vmatprep.subr.mxu0 0.0
  %74 = vmatpush1.msra.mxu0 %v31
  %75 = vmatprep.subr.mxu0 0.0
  %76 = vmatpush1.msra.mxu0 %v30
  %77 = vmatprep.subr.mxu0 0.0
  %78 = vmatpush1.msra.mxu0 %v29
  %79 = vmatprep.subr.mxu0 0.0
  %80 = vmatpush1.msra.mxu0 %v28
  %81 = vmatprep.subr.mxu0 0.0
  %82 = vmatpush1.msra.mxu0 %v27
  %83 = vmatprep.subr.mxu0 0.0
  %84 = vmatpush1.msra.mxu0 %v26
  %85 = vmatprep.subr.mxu0 0.0
  %86 = vmatpush1.msra.mxu0 %v25
  %87 = vmatprep.subr.mxu0 0.0
  %88 = vmatpush1.msra.mxu0 %v24
  %89 = vmatprep.subr.mxu0 0.0
  %90 = vmatpush1.msra.mxu0 %v23
  %91 = vmatprep.subr.mxu0 0.0
  %92 = vmatpush1.msra.mxu0 %v22
  %93 = vmatprep.subr.mxu0 0.0
  %94 = vmatpush2.msra.mxu0 %v53
  %95 = vmatprep.subr.mxu0 0.0
  %96 = vmatpush2.msra.mxu0 %v52
  %97 = vmatprep.subr.mxu0 0.0
  %98 = vmatpush2.msra.mxu0 %v51
  %99 = vmatprep.subr.mxu0 0.0
  %100 = vmatpush2.msra.mxu0 %v50
  %101 = vmatprep.subr.mxu0 0.0
  %102 = vmatpush2.msra.mxu0 %v49
  %103 = vmatprep.subr.mxu0 0.0
  %104 = vmatpush2.msra.mxu0 %v48
  %105 = vmatprep.subr.mxu0 0.0
  %106 = vmatpush2.msra.mxu0 %v47
  %107 = vmatprep.subr.mxu0 0.0
  %108 = vmatpush2.msra.mxu0 %v46
  %109 = vmatprep.subr.mxu0 0.0
  %110 = vmatpush2.msra.mxu0 %v45
  %111 = vmatprep.subr.mxu0 0.0
  %112 = vmatpush2.msra.mxu0 %v44
  %113 = vmatprep.subr.mxu0 0.0
  %114 = vmatpush2.msra.mxu0 %v43
  %115 = vmatprep.subr.mxu0 0.0
  %116 = vmatpush2.msra.mxu0 %v42
  %117 = vmatprep.subr.mxu0 0.0
  %118 = vmatpush2.msra.mxu0 %v41
  %119 = vmatprep.subr.mxu0 0.0
  %120 = vmatpush2.msra.mxu0 %v40
  %121 = vmatprep.subr.mxu0 0.0
  %122 = vmatpush2.msra.mxu0 %v39
  %123 = vmatprep.subr.mxu0 0.0
  %124 = vmatpush2.msra.mxu0 %v38
  %125 = vmatprep.mubr.f32.mxu0 %v15
  %126 = vmatmul.mubr.f32.gmra.mxu0 %v14
  %v127 = vpop.f32.mrf.mxu0
  %v128 = vadd.f32 %v59, %v127
  %v129 = vpop.f32.mrf.mxu0
  %130 = vmatprep.mubr.f32.mxu0 %v17
  %131 = vmatmul.mubr.f32.gmra.mxu0 %v16
  %v132 = vpop.f32.mrf.mxu0
  %v133 = vadd.f32 %v59, %v132
  %v134 = vpop.f32.mrf.mxu0
  %135 = vmatprep.mubr.f32.mxu0 %v19
  %136 = vmatmul.mubr.f32.gmra.mxu0 %v18
  %v137 = vpop.f32.mrf.mxu0
  %v138 = vadd.f32 %v59, %v137
  %v139 = vpop.f32.mrf.mxu0
  %140 = vmatprep.mubr.f32.mxu0 %v21
  %141 = vmatmul.mubr.f32.gmra.mxu0 %v20
  %v142 = vpop.f32.mrf.mxu0
  %v143 = vadd.f32 %v59, %v142
  %v144 = vpop.f32.mrf.mxu0
  %145 = vdwg.mxu0
  %vm146 = vcmask 31744
  %147 = vst.msk [vmem:[%s3] sm:$0xff] %vm146, %v128
  %148 = vst.msk [vmem:[%s3 + $0x8] sm:$0xff] %vm146, %v133
  %149 = vst.msk [vmem:[%s3 + $0x10] sm:$0xff] %vm146, %v138
  %150 = vst.msk [vmem:[%s3 + $0x18] sm:$0xff] %vm146, %v143
  // Predicated region
  $region14: #{neural_network_forward.1} parent=0 // pred_check
    _
  $region15: #{neural_network_forward.1} parent=0 // pred_check_branch
    %152 = sbr.rel (0) target = $region17
  $region16: #{neural_network_forward.1} parent=0 // pred_region
    _
  $region17: #{neural_network_forward.1} parent=0 // pred_fallthru
    _
  // Predicated region
  $region18: #{neural_network_forward.1} parent=0 // pred_check
    _
  $region19: #{neural_network_forward.1} parent=0 // pred_check_branch
    %154 = sbr.rel (0) target = $region21
  $region20: #{neural_network_forward.1} parent=0 // pred_region
    _
  $region21: #{neural_network_forward.1} parent=0 // pred_fallthru
    _

</llo_original>
